<compile_context>
chip_gen: v6e
topology: v6e:2x2x1
jax: 0.10.0
libtpu: 0.0.40
codegen_flags: <defaults>
</compile_context>

<pallas_src>
import functools

import jax
import jax.numpy as jnp
from jax.experimental import pallas as pl
from jax.experimental.pallas import tpu as pltpu


def mlp_fused_kernel(x_ref, w1_ref, b1_ref, w2_ref, b2_ref, w3_ref, b3_ref, o_ref):
    """relu(x@W1+b1) @ W2+b2 -> relu -> @ W3+b3; all operands already in VMEM."""
    cdt = w1_ref.dtype  # MXU input dtype (f32 or bf16); accumulation is always f32.

    x = x_ref[...].astype(cdt)  # in-kernel cast (f32->bf16 path); no-op for f32.
    h = jnp.dot(x, w1_ref[...], preferred_element_type=jnp.float32)
    h = jnp.maximum(h + b1_ref[...], 0.0).astype(cdt)  # bias+ReLU in f32; dropout=id (eval)

    h = jnp.dot(h, w2_ref[...], preferred_element_type=jnp.float32)
    h = jnp.maximum(h + b2_ref[...], 0.0).astype(cdt)

    o = jnp.dot(h, w3_ref[...], preferred_element_type=jnp.float32) + b3_ref[...]
    o_ref[...] = o.astype(o_ref.dtype)


def pack_mlp_params(params, *, pack=8, compute_dtype=None):
    """One-time lane packing of the weights: kron(I_pack, W) block-diagonal form.

    Off-diagonal blocks are exact zeros, so results are bit-identical to the
    per-sample matmul.  Call ONCE and reuse; do not call per forward.
    """
    cdt = compute_dtype if compute_dtype is not None else params["w1"].dtype
    eye = jnp.eye(pack, dtype=jnp.float32)
    packed = {}
    for i in (1, 2, 3):
        w, b = params[f"w{i}"], params[f"b{i}"]
        packed[f"w{i}p"] = jnp.kron(eye, w).astype(cdt)
        packed[f"b{i}p"] = jnp.tile(b, (1, pack)).astype(jnp.float32)  # bias/ReLU in f32
    return packed


@functools.partial(jax.jit, static_argnames=("tile_rows", "vmem_limit_bytes"))
def mlp_forward(x, packed, *, tile_rows=2048, vmem_limit_bytes=None):
    """x: [B, input_dim].  packed: output of pack_mlp_params (w{1,2,3}p, b{1,2,3}p)."""
    B, d_in = x.shape
    w1p, b1p = packed["w1p"], packed["b1p"]
    w2p, b2p = packed["w2p"], packed["b2p"]
    w3p, b3p = packed["w3p"], packed["b3p"]
    pack = w1p.shape[0] // d_in
    d_out = w3p.shape[1] // pack
    out_dtype = x.dtype

    # --- Ragged tail: pad only to the next multiple of `pack` (<= pack-1 rows). ----
    rows = pl.cdiv(B, pack)
    ragged = (B % pack) != 0
    xk = x
    if ragged:
        xk = jnp.concatenate([xk, jnp.zeros((rows * pack - B, d_in), x.dtype)], axis=0)
    xk = xk.reshape(rows, pack * d_in)  # free row-major view when not ragged

    # --- Batch tiling over packed rows; cdiv grid, last block may be partial. ------
    cap = max(16, (tile_rows // 16) * 16)  # 16-sublane aligned: legal for f32 and bf16
    if rows <= cap:
        tile_p, grid = rows, 1             # single full-extent block
    else:
        tile_p, grid = cap, pl.cdiv(rows, cap)

    full = lambda a: pl.BlockSpec(a.shape, lambda i: (0,) * a.ndim)  # VMEM-resident

    flops = 2 * rows * sum(int(w.shape[0]) * int(w.shape[1]) for w in (w1p, w2p, w3p))
    bytes_accessed = (
        rows * pack * d_in * x.dtype.itemsize
        + sum(int(a.size) * a.dtype.itemsize for a in (w1p, b1p, w2p, b2p, w3p, b3p))
        + rows * pack * d_out * jnp.dtype(out_dtype).itemsize
    )

    cp_kwargs = dict(dimension_semantics=("parallel",))
    if vmem_limit_bytes is not None:
        cp_kwargs["vmem_limit_bytes"] = vmem_limit_bytes

    packed_out = pl.pallas_call(
        mlp_fused_kernel,
        out_shape=jax.ShapeDtypeStruct((rows, pack * d_out), out_dtype),
        grid_spec=pltpu.PrefetchScalarGridSpec(
            num_scalar_prefetch=0,
            grid=(grid,),
            in_specs=[
                pl.BlockSpec((tile_p, pack * d_in), lambda i: (i, 0)),
                full(w1p), full(b1p),
                full(w2p), full(b2p),
                full(w3p), full(b3p),
            ],
            out_specs=pl.BlockSpec((tile_p, pack * d_out), lambda i: (i, 0)),
        ),
        compiler_params=pltpu.CompilerParams(**cp_kwargs),
        cost_estimate=pl.CostEstimate(
            flops=flops, transcendentals=0, bytes_accessed=bytes_accessed),
    )(xk, w1p, b1p, w2p, b2p, w3p, b3p)

    out = packed_out.reshape(rows * pack, d_out)  # free view
    if ragged:
        out = out[:B]
    return out


def xavier_uniform(key, fan_in, fan_out, gain):
    """Matches torch.nn.init.xavier_uniform_ bound = gain*sqrt(6/(fan_in+fan_out))."""
    bound = gain * jnp.sqrt(6.0 / (fan_in + fan_out))
    return jax.random.uniform(key, (fan_in, fan_out), jnp.float32, -bound, bound)


def linear_bias(key, fan_in, fan_out):
    """Matches torch.nn.Linear default bias init: U(-1/sqrt(fan_in), 1/sqrt(fan_in))."""
    bound = 1.0 / jnp.sqrt(jnp.float32(fan_in))
    return jax.random.uniform(key, (1, fan_out), jnp.float32, -bound, bound)


def init_mlp_params(key, input_dim, output_dim, num_hidden_lyr=2, hidden_channels=None):
    if not hidden_channels:
        hidden_channels = [input_dim for _ in range(num_hidden_lyr)]
    layer_channels = [input_dim] + hidden_channels + [output_dim]
    relu_gain = jnp.sqrt(2.0)  # nn.init.calculate_gain('relu')
    linear_gain = 1.0          # nn.init.calculate_gain('linear')

    keys = jax.random.split(key, 2 * (len(layer_channels) - 1))
    params = {}
    n_layers = len(layer_channels) - 1
    for i in range(n_layers):
        fi, fo = layer_channels[i], layer_channels[i + 1]
        gain = linear_gain if i == n_layers - 1 else relu_gain
        params[f"w{i+1}"] = xavier_uniform(keys[2 * i], fi, fo, gain)
        params[f"b{i+1}"] = linear_bias(keys[2 * i + 1], fi, fo)
    return params


def mlp_reference(x, params, compute_dtype=None):
    """Pure-JAX reference matching the kernel's dtype handling."""
    dt = compute_dtype if compute_dtype is not None else x.dtype
    h = x.astype(dt)
    h = jnp.dot(h, params["w1"].astype(dt), preferred_element_type=jnp.float32) + params["b1"]
    h = jnp.maximum(h, 0.0).astype(dt)
    h = jnp.dot(h, params["w2"].astype(dt), preferred_element_type=jnp.float32) + params["b2"]
    h = jnp.maximum(h, 0.0).astype(dt)
    o = jnp.dot(h, params["w3"].astype(dt), preferred_element_type=jnp.float32) + params["b3"]
    return o.astype(x.dtype)


if __name__ == "__main__":
    key = jax.random.PRNGKey(0)
    k_x, k_p = jax.random.split(key)

    # Small demo shapes consistent with MLP(32, 16, num_hidden_lyr=2).
    batch, input_dim, output_dim = 200, 32, 16
    x = jax.random.normal(k_x, (batch, input_dim), jnp.float32)
    params = init_mlp_params(k_p, input_dim, output_dim, num_hidden_lyr=2)

    # Pack once (hoisted out of the forward).
    packed_f32 = pack_mlp_params(params, pack=8)
    ref = mlp_reference(x, params)

    # 1) f32, B % pack == 0 (no padding/slicing), single full-extent block.
    out = jax.block_until_ready(mlp_forward(x, packed_f32))
    assert out.shape == (batch, output_dim), out.shape
    assert jnp.allclose(out, ref, atol=1e-5, rtol=1e-5), "f32 mismatch vs reference"

    # 2) f32, multi-block path with a partial last block (tile_rows=16 -> grid of 2).
    out2 = jax.block_until_ready(mlp_forward(x, packed_f32, tile_rows=16))
    assert jnp.allclose(out2, ref, atol=1e-5, rtol=1e-5), "partial-block mismatch"

    # 3) f32, ragged batch (B % pack != 0): pads only to the next multiple of pack.
    x_rag = x[:197]
    out3 = jax.block_until_ready(mlp_forward(x_rag, packed_f32))
    assert out3.shape == (197, output_dim), out3.shape
    assert jnp.allclose(out3, ref[:197], atol=1e-5, rtol=1e-5), "ragged mismatch"

    # 4) bf16 MXU path: f32 x stays f32 in HBM, cast in-kernel; f32 accumulation.
    packed_bf16 = pack_mlp_params(params, pack=8, compute_dtype=jnp.bfloat16)
    out_bf = jax.block_until_ready(mlp_forward(x, packed_bf16))
    ref_bf = mlp_reference(x, params, compute_dtype=jnp.bfloat16)
    assert jnp.allclose(out_bf, ref_bf, atol=2e-3, rtol=2e-3), "bf16 mismatch vs reference"

    # 5) pack=4 variant (recommended for v5e f32 to halve redundant MXU FLOPs).
    packed_p4 = pack_mlp_params(params, pack=4)
    out_p4 = jax.block_until_ready(mlp_forward(x, packed_p4))
    assert jnp.allclose(out_p4, ref, atol=1e-5, rtol=1e-5), "pack=4 mismatch vs reference"

    print("KERNEL_OK")
</pallas_src>

<mosaic_0001>
module attributes {stable_mosaic.version = 11 : i64} {
  func.func @mlp_fused_kernel(%arg0: i32, %arg1: memref<25x256xf32, #tpu.memory_space<vmem>>, %arg2: memref<256x256xf32, #tpu.memory_space<vmem>>, %arg3: memref<1x256xf32, #tpu.memory_space<vmem>>, %arg4: memref<256x256xf32, #tpu.memory_space<vmem>>, %arg5: memref<1x256xf32, #tpu.memory_space<vmem>>, %arg6: memref<256x128xf32, #tpu.memory_space<vmem>>, %arg7: memref<1x128xf32, #tpu.memory_space<vmem>>, %arg8: memref<25x128xf32, #tpu.memory_space<vmem>>) attributes {dimension_semantics = [#tpu.dimension_semantics<parallel>], iteration_bounds = array<i64: 1>, scalar_prefetch = 0 : i64, scratch_operands = 0 : i64, tpu.core_type = #tpu.core_type<tc>, window_params = [{transform_indices = @transform_0, window_bounds = array<i64: 25, 256>}, {pipeline_mode = #tpu.pipeline_mode<synchronous>, transform_indices = @transform_1, window_bounds = array<i64: 256, 256>}, {pipeline_mode = #tpu.pipeline_mode<synchronous>, transform_indices = @transform_2, window_bounds = array<i64: 1, 256>}, {pipeline_mode = #tpu.pipeline_mode<synchronous>, transform_indices = @transform_3, window_bounds = array<i64: 256, 256>}, {pipeline_mode = #tpu.pipeline_mode<synchronous>, transform_indices = @transform_4, window_bounds = array<i64: 1, 256>}, {pipeline_mode = #tpu.pipeline_mode<synchronous>, transform_indices = @transform_5, window_bounds = array<i64: 256, 128>}, {pipeline_mode = #tpu.pipeline_mode<synchronous>, transform_indices = @transform_6, window_bounds = array<i64: 1, 128>}, {transform_indices = @transform_7, window_bounds = array<i64: 25, 128>}]} {
    %c0 = arith.constant 0 : index
    %c0_0 = arith.constant 0 : index
    %0 = vector.load %arg1[%c0, %c0_0] : memref<25x256xf32, #tpu.memory_space<vmem>>, vector<25x256xf32>
    %c0_1 = arith.constant 0 : index
    %c0_2 = arith.constant 0 : index
    %1 = vector.load %arg2[%c0_1, %c0_2] : memref<256x256xf32, #tpu.memory_space<vmem>>, vector<256x256xf32>
    %cst = arith.constant dense<0.000000e+00> : vector<25x256xf32>
    %2 = tpu.matmul %0, %1, %cst {dimension_numbers = #tpu.dot_dimension_numbers<[1], [0], [0], [1], [0, 0, 1, 1], [], []>} : vector<25x256xf32>, vector<256x256xf32>, vector<25x256xf32> -> vector<25x256xf32>
    %c0_3 = arith.constant 0 : index
    %c0_4 = arith.constant 0 : index
    %3 = vector.load %arg3[%c0_3, %c0_4] : memref<1x256xf32, #tpu.memory_space<vmem>>, vector<1x256xf32>
    %4 = vector.broadcast %3 : vector<1x256xf32> to vector<25x256xf32>
    %5 = arith.addf %2, %4 : vector<25x256xf32>
    %cst_5 = arith.constant 0.000000e+00 : f32
    %6 = vector.broadcast %cst_5 : f32 to vector<25x256xf32>
    %7 = arith.maximumf %5, %6 : vector<25x256xf32>
    %c0_6 = arith.constant 0 : index
    %c0_7 = arith.constant 0 : index
    %8 = vector.load %arg4[%c0_6, %c0_7] : memref<256x256xf32, #tpu.memory_space<vmem>>, vector<256x256xf32>
    %cst_8 = arith.constant dense<0.000000e+00> : vector<25x256xf32>
    %9 = tpu.matmul %7, %8, %cst_8 {dimension_numbers = #tpu.dot_dimension_numbers<[1], [0], [0], [1], [0, 0, 1, 1], [], []>} : vector<25x256xf32>, vector<256x256xf32>, vector<25x256xf32> -> vector<25x256xf32>
    %c0_9 = arith.constant 0 : index
    %c0_10 = arith.constant 0 : index
    %10 = vector.load %arg5[%c0_9, %c0_10] : memref<1x256xf32, #tpu.memory_space<vmem>>, vector<1x256xf32>
    %11 = vector.broadcast %10 : vector<1x256xf32> to vector<25x256xf32>
    %12 = arith.addf %9, %11 : vector<25x256xf32>
    %cst_11 = arith.constant 0.000000e+00 : f32
    %13 = vector.broadcast %cst_11 : f32 to vector<25x256xf32>
    %14 = arith.maximumf %12, %13 : vector<25x256xf32>
    %c0_12 = arith.constant 0 : index
    %c0_13 = arith.constant 0 : index
    %15 = vector.load %arg6[%c0_12, %c0_13] : memref<256x128xf32, #tpu.memory_space<vmem>>, vector<256x128xf32>
    %cst_14 = arith.constant dense<0.000000e+00> : vector<25x128xf32>
    %16 = tpu.matmul %14, %15, %cst_14 {dimension_numbers = #tpu.dot_dimension_numbers<[1], [0], [0], [1], [0, 0, 1, 1], [], []>} : vector<25x256xf32>, vector<256x128xf32>, vector<25x128xf32> -> vector<25x128xf32>
    %c0_15 = arith.constant 0 : index
    %c0_16 = arith.constant 0 : index
    %17 = vector.load %arg7[%c0_15, %c0_16] : memref<1x128xf32, #tpu.memory_space<vmem>>, vector<1x128xf32>
    %18 = vector.broadcast %17 : vector<1x128xf32> to vector<25x128xf32>
    %19 = arith.addf %16, %18 : vector<25x128xf32>
    %c0_17 = arith.constant 0 : index
    %c0_18 = arith.constant 0 : index
    %20 = vector.load %arg8[%c0_17, %c0_18] : memref<25x128xf32, #tpu.memory_space<vmem>>, vector<25x128xf32>
    tpu.vector_store %arg8[%c0_17, %c0_18], %19 {strides = array<i32>} : memref<25x128xf32, #tpu.memory_space<vmem>>, vector<25x128xf32>,
    return
  }
  func.func @transform_0(%arg0: i32) -> (i32, i32) {
    %c0_i32 = arith.constant 0 : i32
    %c0_i32_0 = arith.constant 0 : i32
    return %arg0, %c0_i32 : i32, i32
  }
  func.func @transform_1(%arg0: i32) -> (i32, i32) {
    %c0_i32 = arith.constant 0 : i32
    %c0_i32_0 = arith.constant 0 : i32
    %c0_i32_1 = arith.constant 0 : i32
    return %c0_i32, %c0_i32_0 : i32, i32
  }
  func.func @transform_2(%arg0: i32) -> (i32, i32) {
    %c0_i32 = arith.constant 0 : i32
    %c0_i32_0 = arith.constant 0 : i32
    %c0_i32_1 = arith.constant 0 : i32
    return %c0_i32, %c0_i32_0 : i32, i32
  }
  func.func @transform_3(%arg0: i32) -> (i32, i32) {
    %c0_i32 = arith.constant 0 : i32
    %c0_i32_0 = arith.constant 0 : i32
    %c0_i32_1 = arith.constant 0 : i32
    return %c0_i32, %c0_i32_0 : i32, i32
  }
  func.func @transform_4(%arg0: i32) -> (i32, i32) {
    %c0_i32 = arith.constant 0 : i32
    %c0_i32_0 = arith.constant 0 : i32
    %c0_i32_1 = arith.constant 0 : i32
    return %c0_i32, %c0_i32_0 : i32, i32
  }
  func.func @transform_5(%arg0: i32) -> (i32, i32) {
    %c0_i32 = arith.constant 0 : i32
    %c0_i32_0 = arith.constant 0 : i32
    %c0_i32_1 = arith.constant 0 : i32
    return %c0_i32, %c0_i32_0 : i32, i32
  }
  func.func @transform_6(%arg0: i32) -> (i32, i32) {
    %c0_i32 = arith.constant 0 : i32
    %c0_i32_0 = arith.constant 0 : i32
    %c0_i32_1 = arith.constant 0 : i32
    return %c0_i32, %c0_i32_0 : i32, i32
  }
  func.func @transform_7(%arg0: i32) -> (i32, i32) {
    %c0_i32 = arith.constant 0 : i32
    %c0_i32_0 = arith.constant 0 : i32
    return %arg0, %c0_i32 : i32, i32
  }
}

</mosaic_0001>

<llo_original>
// kernel: mlp_forward.1
$region0: #{mlp_forward.1}
  #allocation0 [shape = 'u32[]', space=smem, size = 0x4, offset = 0x4, fixed_abs, tag = 'smem constant byte address 0x4 - core index']
  #allocation1 [shape = 'u32[144,128]{1,0:T(1,128)}', space=vmem, size = 0x12000, scoped, tag = 'internal scratch']
  %s0 = inlined_call_operand.vmem [shape: f32[25,256], index: 0, kind: input, shape index: {}]
  %s1 = inlined_call_operand.vmem [shape: f32[256,256], index: 1, kind: input, shape index: {}]
  %s2 = inlined_call_operand.vmem [shape: f32[1,256], index: 2, kind: input, shape index: {}]
  %s3 = inlined_call_operand.hbm [shape: f32[256,256], index: 3, kind: input, shape index: {}]
  %s4 = inlined_call_operand.vmem [shape: f32[1,256], index: 4, kind: input, shape index: {}]
  %s5 = inlined_call_operand.hbm [shape: f32[256,128], index: 5, kind: input, shape index: {}]
  %s6 = inlined_call_operand.vmem [shape: f32[1,128], index: 6, kind: input, shape index: {}]
  %s7 = inlined_call_operand.vmem [shape: f32[25,128], index: 7, kind: output, shape index: {}]
  %s8 = sld [smem:[#allocation0]]
  $region46: #{mlp_forward.1} parent=0
    _
  %s10 = ssub.s32 1, %s8
  %s11 = scalar_select 0, %s10, %s8
  $region1: #{mlp_forward.1} parent=0
    #allocation2 [shape = 'u8[262144]{0}', space=vmem, size = 0x40000, scoped, tag = 'input window, operand 3, single buffered']
    #allocation3 [shape = 's32[1]{0}', space=sflag, size = 0x4, scoped, tag = 'scoped memory for mlp_forward.1']
    #allocation4 [shape = 'u8[131072]{0}', space=vmem, size = 0x20000, scoped, tag = 'input window, operand 5, single buffered']
    #allocation5 [shape = 's32[1]{0}', space=sflag, size = 0x4, scoped, tag = 'scoped memory for mlp_forward.1']
    %12 = vsyncpa [#allocation3], 0
    %13 = vsyncpa [#allocation5], 0
    // Predicated region
    $region2: #{mlp_forward.1} parent=1 // pred_check
      _
    $region3: #{mlp_forward.1} parent=1 // pred_check_branch
      %15 = sbr.rel (0) target = $region5
    $region4: #{mlp_forward.1} parent=1 // pred_region
      _
    $region5: #{mlp_forward.1} parent=1 // pred_fallthru
      _
    // Predicated region
    $region6: #{mlp_forward.1} parent=1 // pred_check
      _
    $region7: #{mlp_forward.1} parent=1 // pred_check_branch
      %17 = sbr.rel (0) target = $region9
    $region8: #{mlp_forward.1} parent=1 // pred_region
      _
    $region9: #{mlp_forward.1} parent=1 // pred_fallthru
      _
    // Predicated region
    $region10: #{mlp_forward.1} parent=1 // pred_check
      _
    $region11: #{mlp_forward.1} parent=1 // pred_check_branch
      %19 = sbr.rel (0) target = $region13
    $region12: #{mlp_forward.1} parent=1 // pred_region
      _
    $region13: #{mlp_forward.1} parent=1 // pred_fallthru
      _
    // Predicated region
    $region14: #{mlp_forward.1} parent=1 // pred_check
      _
    $region15: #{mlp_forward.1} parent=1 // pred_check_branch
      %21 = sbr.rel (0) target = $region17
    $region16: #{mlp_forward.1} parent=1 // pred_region
      %s23 = ssub.s32 8192, 8192
      %24 = vsyncadd [#allocation3], %s23
      %s25 = sshll.u32 [#allocation2], 4
      %s26 = int_to_ptr.vmem [resolvable:$true] %s25
      %31 = dma.hbm_to_vmem [thread:$0]  %s3, 8192, %s26, [#allocation3], 256, 256, 16
    $region17: #{mlp_forward.1} parent=1 // pred_fallthru
      _
    // Predicated region
    $region18: #{mlp_forward.1} parent=1 // pred_check
      _
    $region19: #{mlp_forward.1} parent=1 // pred_check_branch
      %33 = sbr.rel (0) target = $region21
    $region20: #{mlp_forward.1} parent=1 // pred_region
      _
    $region21: #{mlp_forward.1} parent=1 // pred_fallthru
      _
    // Predicated region
    $region22: #{mlp_forward.1} parent=1 // pred_check
      _
    $region23: #{mlp_forward.1} parent=1 // pred_check_branch
      %35 = sbr.rel (0) target = $region25
    $region24: #{mlp_forward.1} parent=1 // pred_region
      %s37 = ssub.s32 4096, 4096
      %38 = vsyncadd [#allocation5], %s37
      %s39 = sshll.u32 [#allocation4], 4
      %s40 = int_to_ptr.vmem [resolvable:$true] %s39
      %45 = dma.hbm_to_vmem [thread:$0]  %s5, 4096, %s40, [#allocation5], 128, 128, 8
    $region25: #{mlp_forward.1} parent=1 // pred_fallthru
      _
    // Predicated region
    $region26: #{mlp_forward.1} parent=1 // pred_check
      _
    $region27: #{mlp_forward.1} parent=1 // pred_check_branch
      %47 = sbr.rel (0) target = $region29
    $region28: #{mlp_forward.1} parent=1 // pred_region
      _
    $region29: #{mlp_forward.1} parent=1 // pred_fallthru
      _
    // Predicated region
    $region30: #{mlp_forward.1} parent=1 // pred_check
      _
    $region31: #{mlp_forward.1} parent=1 // pred_check_branch
      %49 = sbr.rel (0) target = $region33
    $region32: #{mlp_forward.1} parent=1 // pred_region
      %50 = dma.done [#allocation3], 8192
    $region33: #{mlp_forward.1} parent=1 // pred_fallthru
      _
    // Predicated region
    $region34: #{mlp_forward.1} parent=1 // pred_check
      _
    $region35: #{mlp_forward.1} parent=1 // pred_check_branch
      %52 = sbr.rel (0) target = $region37
    $region36: #{mlp_forward.1} parent=1 // pred_region
      %53 = dma.done [#allocation5], 4096
    $region37: #{mlp_forward.1} parent=1 // pred_fallthru
      _
    %v54 = vld [vmem:[%s0] sm:$0xff]
    %v55 = vld [vmem:[%s0 + $0x8] sm:$0xff]
    %v56 = vld [vmem:[%s0 + $0x10] sm:$0xff]
    %v57 = vld [vmem:[%s0 + $0x18] sm:$0xff]
    %v58 = vld [vmem:[%s0 + $0x20] sm:$0xff]
    %v59 = vld [vmem:[%s0 + $0x28] sm:$0xff]
    %v60 = vld [vmem:[%s0 + $0x30] sm:$0x1]
    %v61 = vld [vmem:[%s0 + $0x38] sm:$0x1]
    %v62 = vld [vmem:[%s1] sm:$0xff]
    %v63 = vld [vmem:[%s1 + $0x8] sm:$0xff]
    %v64 = vld [vmem:[%s1 + $0x10] sm:$0xff]
    %v65 = vld [vmem:[%s1 + $0x18] sm:$0xff]
    %v66 = vld [vmem:[%s1 + $0x20] sm:$0xff]
    %v67 = vld [vmem:[%s1 + $0x28] sm:$0xff]
    %v68 = vld [vmem:[%s1 + $0x30] sm:$0xff]
    %v69 = vld [vmem:[%s1 + $0x38] sm:$0xff]
    %v70 = vld [vmem:[%s1 + $0x40] sm:$0xff]
    %v71 = vld [vmem:[%s1 + $0x48] sm:$0xff]
    %v72 = vld [vmem:[%s1 + $0x50] sm:$0xff]
    %v73 = vld [vmem:[%s1 + $0x58] sm:$0xff]
    %v74 = vld [vmem:[%s1 + $0x60] sm:$0xff]
    %v75 = vld [vmem:[%s1 + $0x68] sm:$0xff]
    %v76 = vld [vmem:[%s1 + $0x70] sm:$0xff]
    %v77 = vld [vmem:[%s1 + $0x78] sm:$0xff]
    %v78 = vld [vmem:[%s1 + $0x80] sm:$0xff]
    %v79 = vld [vmem:[%s1 + $0x88] sm:$0xff]
    %v80 = vld [vmem:[%s1 + $0x90] sm:$0xff]
    %v81 = vld [vmem:[%s1 + $0x98] sm:$0xff]
    %v82 = vld [vmem:[%s1 + $0xa0] sm:$0xff]
    %v83 = vld [vmem:[%s1 + $0xa8] sm:$0xff]
    %v84 = vld [vmem:[%s1 + $0xb0] sm:$0xff]
    %v85 = vld [vmem:[%s1 + $0xb8] sm:$0xff]
    %v86 = vld [vmem:[%s1 + $0xc0] sm:$0xff]
    %v87 = vld [vmem:[%s1 + $0xc8] sm:$0xff]
    %v88 = vld [vmem:[%s1 + $0xd0] sm:$0xff]
    %v89 = vld [vmem:[%s1 + $0xd8] sm:$0xff]
    %v90 = vld [vmem:[%s1 + $0xe0] sm:$0xff]
    %v91 = vld [vmem:[%s1 + $0xe8] sm:$0xff]
    %v92 = vld [vmem:[%s1 + $0xf0] sm:$0xff]
    %v93 = vld [vmem:[%s1 + $0xf8] sm:$0xff]
    %v94 = vld [vmem:[%s1 + $0x100] sm:$0xff]
    %v95 = vld [vmem:[%s1 + $0x108] sm:$0xff]
    %v96 = vld [vmem:[%s1 + $0x110] sm:$0xff]
    %v97 = vld [vmem:[%s1 + $0x118] sm:$0xff]
    %v98 = vld [vmem:[%s1 + $0x120] sm:$0xff]
    %v99 = vld [vmem:[%s1 + $0x128] sm:$0xff]
    %v100 = vld [vmem:[%s1 + $0x130] sm:$0xff]
    %v101 = vld [vmem:[%s1 + $0x138] sm:$0xff]
    %v102 = vld [vmem:[%s1 + $0x140] sm:$0xff]
    %v103 = vld [vmem:[%s1 + $0x148] sm:$0xff]
    %v104 = vld [vmem:[%s1 + $0x150] sm:$0xff]
    %v105 = vld [vmem:[%s1 + $0x158] sm:$0xff]
    %v106 = vld [vmem:[%s1 + $0x160] sm:$0xff]
    %v107 = vld [vmem:[%s1 + $0x168] sm:$0xff]
    %v108 = vld [vmem:[%s1 + $0x170] sm:$0xff]
    %v109 = vld [vmem:[%s1 + $0x178] sm:$0xff]
    %v110 = vld [vmem:[%s1 + $0x180] sm:$0xff]
    %v111 = vld [vmem:[%s1 + $0x188] sm:$0xff]
    %v112 = vld [vmem:[%s1 + $0x190] sm:$0xff]
    %v113 = vld [vmem:[%s1 + $0x198] sm:$0xff]
    %v114 = vld [vmem:[%s1 + $0x1a0] sm:$0xff]
    %v115 = vld [vmem:[%s1 + $0x1a8] sm:$0xff]
    %v116 = vld [vmem:[%s1 + $0x1b0] sm:$0xff]
    %v117 = vld [vmem:[%s1 + $0x1b8] sm:$0xff]
    %v118 = vld [vmem:[%s1 + $0x1c0] sm:$0xff]
    %v119 = vld [vmem:[%s1 + $0x1c8] sm:$0xff]
    %v120 = vld [vmem:[%s1 + $0x1d0] sm:$0xff]
    %v121 = vld [vmem:[%s1 + $0x1d8] sm:$0xff]
    %v122 = vld [vmem:[%s1 + $0x1e0] sm:$0xff]
    %v123 = vld [vmem:[%s1 + $0x1e8] sm:$0xff]
    %v124 = vld [vmem:[%s1 + $0x1f0] sm:$0xff]
    %v125 = vld [vmem:[%s1 + $0x1f8] sm:$0xff]
    %v126 = vld [vmem:[%s2] sm:$0x3]
    %v128 = vlaneseq
    %v129 = vshrl.u32 %v128, 7
    %v130 = vsub.s32 0, %v129
    %v131 = vrot.slane %v126, %v130
    %v132 = vlaneseq
    %v133 = vshrl.u32 %v132, 7
    %v134 = vsub.s32 1, %v133
    %v135 = vrot.slane %v126, %v134
    %138 = vmatprep.subr.mxu0 %v93
    %139 = vmatpush1.msra.mxu0 %v92
    %140 = vmatprep.subr.mxu0 %v91
    %141 = vmatpush1.msra.mxu0 %v90
    %142 = vmatprep.subr.mxu0 %v89
    %143 = vmatpush1.msra.mxu0 %v88
    %144 = vmatprep.subr.mxu0 %v87
    %145 = vmatpush1.msra.mxu0 %v86
    %146 = vmatprep.subr.mxu0 %v85
    %147 = vmatpush1.msra.mxu0 %v84
    %148 = vmatprep.subr.mxu0 %v83
    %149 = vmatpush1.msra.mxu0 %v82
    %150 = vmatprep.subr.mxu0 %v81
    %151 = vmatpush1.msra.mxu0 %v80
    %152 = vmatprep.subr.mxu0 %v79
    %153 = vmatpush1.msra.mxu0 %v78
    %154 = vmatprep.subr.mxu0 %v77
    %155 = vmatpush1.msra.mxu0 %v76
    %156 = vmatprep.subr.mxu0 %v75
    %157 = vmatpush1.msra.mxu0 %v74
    %158 = vmatprep.subr.mxu0 %v73
    %159 = vmatpush1.msra.mxu0 %v72
    %160 = vmatprep.subr.mxu0 %v71
    %161 = vmatpush1.msra.mxu0 %v70
    %162 = vmatprep.subr.mxu0 %v69
    %163 = vmatpush1.msra.mxu0 %v68
    %164 = vmatprep.subr.mxu0 %v67
    %165 = vmatpush1.msra.mxu0 %v66
    %166 = vmatprep.subr.mxu0 %v65
    %167 = vmatpush1.msra.mxu0 %v64
    %168 = vmatprep.subr.mxu0 %v63
    %169 = vmatpush1.msra.mxu0 %v62
    %170 = vmatprep.subr.mxu0 %v125
    %171 = vmatpush2.msra.mxu0 %v124
    %172 = vmatprep.subr.mxu0 %v123
    %173 = vmatpush2.msra.mxu0 %v122
    %174 = vmatprep.subr.mxu0 %v121
    %175 = vmatpush2.msra.mxu0 %v120
    %176 = vmatprep.subr.mxu0 %v119
    %177 = vmatpush2.msra.mxu0 %v118
    %178 = vmatprep.subr.mxu0 %v117
    %179 = vmatpush2.msra.mxu0 %v116
    %180 = vmatprep.subr.mxu0 %v115
    %181 = vmatpush2.msra.mxu0 %v114
    %182 = vmatprep.subr.mxu0 %v113
    %183 = vmatpush2.msra.mxu0 %v112
    %184 = vmatprep.subr.mxu0 %v111
    %185 = vmatpush2.msra.mxu0 %v110
    %186 = vmatprep.subr.mxu0 %v109
    %187 = vmatpush2.msra.mxu0 %v108
    %188 = vmatprep.subr.mxu0 %v107
    %189 = vmatpush2.msra.mxu0 %v106
    %190 = vmatprep.subr.mxu0 %v105
    %191 = vmatpush2.msra.mxu0 %v104
    %192 = vmatprep.subr.mxu0 %v103
    %193 = vmatpush2.msra.mxu0 %v102
    %194 = vmatprep.subr.mxu0 %v101
    %195 = vmatpush2.msra.mxu0 %v100
    %196 = vmatprep.subr.mxu0 %v99
    %197 = vmatpush2.msra.mxu0 %v98
    %198 = vmatprep.subr.mxu0 %v97
    %199 = vmatpush2.msra.mxu0 %v96
    %200 = vmatprep.subr.mxu0 %v95
    %201 = vmatpush2.msra.mxu0 %v94
    %202 = vmatprep.mubr.f32.mxu0 %v55
    %203 = vmatmul.mubr.f32.gmra.mxu0 %v54
    %v204 = vpop.f32.mrf.mxu0
    %v205 = vadd.f32 %v131, %v204
    %v206 = vpop.f32.mrf.mxu0
    %v207 = vadd.f32 %v135, %v206
    %208 = vmatprep.mubr.f32.mxu0 %v57
    %209 = vmatmul.mubr.f32.gmra.mxu0 %v56
    %v210 = vpop.f32.mrf.mxu0
    %v211 = vadd.f32 %v131, %v210
    %v212 = vpop.f32.mrf.mxu0
    %v213 = vadd.f32 %v135, %v212
    %214 = vmatprep.mubr.f32.mxu0 %v59
    %215 = vmatmul.mubr.f32.gmra.mxu0 %v58
    %v216 = vpop.f32.mrf.mxu0
    %v217 = vadd.f32 %v131, %v216
    %v218 = vpop.f32.mrf.mxu0
    %v219 = vadd.f32 %v135, %v218
    %220 = vmatprep.mubr.f32.mxu0 %v61
    %221 = vmatmul.mubr.f32.gmra.mxu0 %v60
    %v222 = vpop.f32.mrf.mxu0
    %v223 = vadd.f32 %v131, %v222
    %v224 = vpop.f32.mrf.mxu0
    %v225 = vadd.f32 %v135, %v224
    %226 = vdwg.mxu0
    %v227 = vmax.f32 %v205, 0.0
    %v228 = vmax.f32 %v207, 0.0
    %v229 = vmax.f32 %v211, 0.0
    %v230 = vmax.f32 %v213, 0.0
    %v231 = vmax.f32 %v217, 0.0
    %v232 = vmax.f32 %v219, 0.0
    %v233 = vmax.f32 %v223, 0.0
    %v234 = vmax.f32 %v225, 0.0
    %v235 = vld [vmem:[#allocation2] sm:$0xff]
    %v236 = vld [vmem:[#allocation2 + $0x8] sm:$0xff]
    %v237 = vld [vmem:[#allocation2 + $0x10] sm:$0xff]
    %v238 = vld [vmem:[#allocation2 + $0x18] sm:$0xff]
    %v239 = vld [vmem:[#allocation2 + $0x20] sm:$0xff]
    %v240 = vld [vmem:[#allocation2 + $0x28] sm:$0xff]
    %v241 = vld [vmem:[#allocation2 + $0x30] sm:$0xff]
    %v242 = vld [vmem:[#allocation2 + $0x38] sm:$0xff]
    %v243 = vld [vmem:[#allocation2 + $0x40] sm:$0xff]
    %v244 = vld [vmem:[#allocation2 + $0x48] sm:$0xff]
    %v245 = vld [vmem:[#allocation2 + $0x50] sm:$0xff]
    %v246 = vld [vmem:[#allocation2 + $0x58] sm:$0xff]
    %v247 = vld [vmem:[#allocation2 + $0x60] sm:$0xff]
    %v248 = vld [vmem:[#allocation2 + $0x68] sm:$0xff]
    %v249 = vld [vmem:[#allocation2 + $0x70] sm:$0xff]
    %v250 = vld [vmem:[#allocation2 + $0x78] sm:$0xff]
    %v251 = vld [vmem:[#allocation2 + $0x80] sm:$0xff]
    %v252 = vld [vmem:[#allocation2 + $0x88] sm:$0xff]
    %v253 = vld [vmem:[#allocation2 + $0x90] sm:$0xff]
    %v254 = vld [vmem:[#allocation2 + $0x98] sm:$0xff]
    %v255 = vld [vmem:[#allocation2 + $0xa0] sm:$0xff]
    %v256 = vld [vmem:[#allocation2 + $0xa8] sm:$0xff]
    %v257 = vld [vmem:[#allocation2 + $0xb0] sm:$0xff]
    %v258 = vld [vmem:[#allocation2 + $0xb8] sm:$0xff]
    %v259 = vld [vmem:[#allocation2 + $0xc0] sm:$0xff]
    %v260 = vld [vmem:[#allocation2 + $0xc8] sm:$0xff]
    %v261 = vld [vmem:[#allocation2 + $0xd0] sm:$0xff]
    %v262 = vld [vmem:[#allocation2 + $0xd8] sm:$0xff]
    %v263 = vld [vmem:[#allocation2 + $0xe0] sm:$0xff]
    %v264 = vld [vmem:[#allocation2 + $0xe8] sm:$0xff]
    %v265 = vld [vmem:[#allocation2 + $0xf0] sm:$0xff]
    %v266 = vld [vmem:[#allocation2 + $0xf8] sm:$0xff]
    %v267 = vld [vmem:[#allocation2 + $0x100] sm:$0xff]
    %v268 = vld [vmem:[#allocation2 + $0x108] sm:$0xff]
    %v269 = vld [vmem:[#allocation2 + $0x110] sm:$0xff]
    %v270 = vld [vmem:[#allocation2 + $0x118] sm:$0xff]
    %v271 = vld [vmem:[#allocation2 + $0x120] sm:$0xff]
    %v272 = vld [vmem:[#allocation2 + $0x128] sm:$0xff]
    %v273 = vld [vmem:[#allocation2 + $0x130] sm:$0xff]
    %v274 = vld [vmem:[#allocation2 + $0x138] sm:$0xff]
    %v275 = vld [vmem:[#allocation2 + $0x140] sm:$0xff]
    %v276 = vld [vmem:[#allocation2 + $0x148] sm:$0xff]
    %v277 = vld [vmem:[#allocation2 + $0x150] sm:$0xff]
    %v278 = vld [vmem:[#allocation2 + $0x158] sm:$0xff]
    %v279 = vld [vmem:[#allocation2 + $0x160] sm:$0xff]
    %v280 = vld [vmem:[#allocation2 + $0x168] sm:$0xff]
    %v281 = vld [vmem:[#allocation2 + $0x170] sm:$0xff]
    %v282 = vld [vmem:[#allocation2 + $0x178] sm:$0xff]
    %v283 = vld [vmem:[#allocation2 + $0x180] sm:$0xff]
    %v284 = vld [vmem:[#allocation2 + $0x188] sm:$0xff]
    %v285 = vld [vmem:[#allocation2 + $0x190] sm:$0xff]
    %v286 = vld [vmem:[#allocation2 + $0x198] sm:$0xff]
    %v287 = vld [vmem:[#allocation2 + $0x1a0] sm:$0xff]
    %v288 = vld [vmem:[#allocation2 + $0x1a8] sm:$0xff]
    %v289 = vld [vmem:[#allocation2 + $0x1b0] sm:$0xff]
    %v290 = vld [vmem:[#allocation2 + $0x1b8] sm:$0xff]
    %v291 = vld [vmem:[#allocation2 + $0x1c0] sm:$0xff]
    %v292 = vld [vmem:[#allocation2 + $0x1c8] sm:$0xff]
    %v293 = vld [vmem:[#allocation2 + $0x1d0] sm:$0xff]
    %v294 = vld [vmem:[#allocation2 + $0x1d8] sm:$0xff]
    %v295 = vld [vmem:[#allocation2 + $0x1e0] sm:$0xff]
    %v296 = vld [vmem:[#allocation2 + $0x1e8] sm:$0xff]
    %v297 = vld [vmem:[#allocation2 + $0x1f0] sm:$0xff]
    %v298 = vld [vmem:[#allocation2 + $0x1f8] sm:$0xff]
    %v299 = vld [vmem:[%s4] sm:$0x3]
    %v301 = vlaneseq
    %v302 = vshrl.u32 %v301, 7
    %v303 = vsub.s32 0, %v302
    %v304 = vrot.slane %v299, %v303
    %v305 = vlaneseq
    %v306 = vshrl.u32 %v305, 7
    %v307 = vsub.s32 1, %v306
    %v308 = vrot.slane %v299, %v307
    %311 = vmatprep.subr.mxu0 %v266
    %312 = vmatpush1.msra.mxu0 %v265
    %313 = vmatprep.subr.mxu0 %v264
    %314 = vmatpush1.msra.mxu0 %v263
    %315 = vmatprep.subr.mxu0 %v262
    %316 = vmatpush1.msra.mxu0 %v261
    %317 = vmatprep.subr.mxu0 %v260
    %318 = vmatpush1.msra.mxu0 %v259
    %319 = vmatprep.subr.mxu0 %v258
    %320 = vmatpush1.msra.mxu0 %v257
    %321 = vmatprep.subr.mxu0 %v256
    %322 = vmatpush1.msra.mxu0 %v255
    %323 = vmatprep.subr.mxu0 %v254
    %324 = vmatpush1.msra.mxu0 %v253
    %325 = vmatprep.subr.mxu0 %v252
    %326 = vmatpush1.msra.mxu0 %v251
    %327 = vmatprep.subr.mxu0 %v250
    %328 = vmatpush1.msra.mxu0 %v249
    %329 = vmatprep.subr.mxu0 %v248
    %330 = vmatpush1.msra.mxu0 %v247
    %331 = vmatprep.subr.mxu0 %v246
    %332 = vmatpush1.msra.mxu0 %v245
    %333 = vmatprep.subr.mxu0 %v244
    %334 = vmatpush1.msra.mxu0 %v243
    %335 = vmatprep.subr.mxu0 %v242
    %336 = vmatpush1.msra.mxu0 %v241
    %337 = vmatprep.subr.mxu0 %v240
    %338 = vmatpush1.msra.mxu0 %v239
    %339 = vmatprep.subr.mxu0 %v238
    %340 = vmatpush1.msra.mxu0 %v237
    %341 = vmatprep.subr.mxu0 %v236
    %342 = vmatpush1.msra.mxu0 %v235
    %343 = vmatprep.subr.mxu0 %v298
    %344 = vmatpush2.msra.mxu0 %v297
    %345 = vmatprep.subr.mxu0 %v296
    %346 = vmatpush2.msra.mxu0 %v295
    %347 = vmatprep.subr.mxu0 %v294
    %348 = vmatpush2.msra.mxu0 %v293
    %349 = vmatprep.subr.mxu0 %v292
    %350 = vmatpush2.msra.mxu0 %v291
    %351 = vmatprep.subr.mxu0 %v290
    %352 = vmatpush2.msra.mxu0 %v289
    %353 = vmatprep.subr.mxu0 %v288
    %354 = vmatpush2.msra.mxu0 %v287
    %355 = vmatprep.subr.mxu0 %v286
    %356 = vmatpush2.msra.mxu0 %v285
    %357 = vmatprep.subr.mxu0 %v284
    %358 = vmatpush2.msra.mxu0 %v283
    %359 = vmatprep.subr.mxu0 %v282
    %360 = vmatpush2.msra.mxu0 %v281
    %361 = vmatprep.subr.mxu0 %v280
    %362 = vmatpush2.msra.mxu0 %v279
    %363 = vmatprep.subr.mxu0 %v278
    %364 = vmatpush2.msra.mxu0 %v277
    %365 = vmatprep.subr.mxu0 %v276
    %366 = vmatpush2.msra.mxu0 %v275
    %367 = vmatprep.subr.mxu0 %v274
    %368 = vmatpush2.msra.mxu0 %v273
    %369 = vmatprep.subr.mxu0 %v272
    %370 = vmatpush2.msra.mxu0 %v271
    %371 = vmatprep.subr.mxu0 %v270
    %372 = vmatpush2.msra.mxu0 %v269
    %373 = vmatprep.subr.mxu0 %v268
    %374 = vmatpush2.msra.mxu0 %v267
    %375 = vmatprep.mubr.f32.mxu0 %v228
    %376 = vmatmul.mubr.f32.gmra.mxu0 %v227
    %v377 = vpop.f32.mrf.mxu0
    %v378 = vadd.f32 %v304, %v377
    %v379 = vpop.f32.mrf.mxu0
    %v380 = vadd.f32 %v308, %v379
    %381 = vmatprep.mubr.f32.mxu0 %v230
    %382 = vmatmul.mubr.f32.gmra.mxu0 %v229
    %v383 = vpop.f32.mrf.mxu0
    %v384 = vadd.f32 %v304, %v383
    %v385 = vpop.f32.mrf.mxu0
    %v386 = vadd.f32 %v308, %v385
    %387 = vmatprep.mubr.f32.mxu0 %v232
    %388 = vmatmul.mubr.f32.gmra.mxu0 %v231
    %v389 = vpop.f32.mrf.mxu0
    %v390 = vadd.f32 %v304, %v389
    %v391 = vpop.f32.mrf.mxu0
    %v392 = vadd.f32 %v308, %v391
    %393 = vmatprep.mubr.f32.mxu0 %v234
    %394 = vmatmul.mubr.f32.gmra.mxu0 %v233
    %v395 = vpop.f32.mrf.mxu0
    %v396 = vadd.f32 %v304, %v395
    %v397 = vpop.f32.mrf.mxu0
    %v398 = vadd.f32 %v308, %v397
    %399 = vdwg.mxu0
    %v400 = vmax.f32 %v378, 0.0
    %v401 = vmax.f32 %v380, 0.0
    %v402 = vmax.f32 %v384, 0.0
    %v403 = vmax.f32 %v386, 0.0
    %v404 = vmax.f32 %v390, 0.0
    %v405 = vmax.f32 %v392, 0.0
    %v406 = vmax.f32 %v396, 0.0
    %v407 = vmax.f32 %v398, 0.0
    %v408 = vld [vmem:[#allocation4] sm:$0xff]
    %v409 = vld [vmem:[#allocation4 + $0x8] sm:$0xff]
    %v410 = vld [vmem:[#allocation4 + $0x10] sm:$0xff]
    %v411 = vld [vmem:[#allocation4 + $0x18] sm:$0xff]
    %v412 = vld [vmem:[#allocation4 + $0x20] sm:$0xff]
    %v413 = vld [vmem:[#allocation4 + $0x28] sm:$0xff]
    %v414 = vld [vmem:[#allocation4 + $0x30] sm:$0xff]
    %v415 = vld [vmem:[#allocation4 + $0x38] sm:$0xff]
    %v416 = vld [vmem:[#allocation4 + $0x40] sm:$0xff]
    %v417 = vld [vmem:[#allocation4 + $0x48] sm:$0xff]
    %v418 = vld [vmem:[#allocation4 + $0x50] sm:$0xff]
    %v419 = vld [vmem:[#allocation4 + $0x58] sm:$0xff]
    %v420 = vld [vmem:[#allocation4 + $0x60] sm:$0xff]
    %v421 = vld [vmem:[#allocation4 + $0x68] sm:$0xff]
    %v422 = vld [vmem:[#allocation4 + $0x70] sm:$0xff]
    %v423 = vld [vmem:[#allocation4 + $0x78] sm:$0xff]
    %v424 = vld [vmem:[#allocation4 + $0x80] sm:$0xff]
    %v425 = vld [vmem:[#allocation4 + $0x88] sm:$0xff]
    %v426 = vld [vmem:[#allocation4 + $0x90] sm:$0xff]
    %v427 = vld [vmem:[#allocation4 + $0x98] sm:$0xff]
    %v428 = vld [vmem:[#allocation4 + $0xa0] sm:$0xff]
    %v429 = vld [vmem:[#allocation4 + $0xa8] sm:$0xff]
    %v430 = vld [vmem:[#allocation4 + $0xb0] sm:$0xff]
    %v431 = vld [vmem:[#allocation4 + $0xb8] sm:$0xff]
    %v432 = vld [vmem:[#allocation4 + $0xc0] sm:$0xff]
    %v433 = vld [vmem:[#allocation4 + $0xc8] sm:$0xff]
    %v434 = vld [vmem:[#allocation4 + $0xd0] sm:$0xff]
    %v435 = vld [vmem:[#allocation4 + $0xd8] sm:$0xff]
    %v436 = vld [vmem:[#allocation4 + $0xe0] sm:$0xff]
    %v437 = vld [vmem:[#allocation4 + $0xe8] sm:$0xff]
    %v438 = vld [vmem:[#allocation4 + $0xf0] sm:$0xff]
    %v439 = vld [vmem:[#allocation4 + $0xf8] sm:$0xff]
    %v440 = vld [vmem:[%s6] sm:$0x1]
    %v442 = vlaneseq
    %v443 = vshrl.u32 %v442, 7
    %v444 = vsub.s32 0, %v443
    %v445 = vrot.slane %v440, %v444
    %447 = vmatprep.subr.mxu0 0.0
    %448 = vmatpush1.msra.mxu0 %v423
    %449 = vmatprep.subr.mxu0 0.0
    %450 = vmatpush1.msra.mxu0 %v422
    %451 = vmatprep.subr.mxu0 0.0
    %452 = vmatpush1.msra.mxu0 %v421
    %453 = vmatprep.subr.mxu0 0.0
    %454 = vmatpush1.msra.mxu0 %v420
    %455 = vmatprep.subr.mxu0 0.0
    %456 = vmatpush1.msra.mxu0 %v419
    %457 = vmatprep.subr.mxu0 0.0
    %458 = vmatpush1.msra.mxu0 %v418
    %459 = vmatprep.subr.mxu0 0.0
    %460 = vmatpush1.msra.mxu0 %v417
    %461 = vmatprep.subr.mxu0 0.0
    %462 = vmatpush1.msra.mxu0 %v416
    %463 = vmatprep.subr.mxu0 0.0
    %464 = vmatpush1.msra.mxu0 %v415
    %465 = vmatprep.subr.mxu0 0.0
    %466 = vmatpush1.msra.mxu0 %v414
    %467 = vmatprep.subr.mxu0 0.0
    %468 = vmatpush1.msra.mxu0 %v413
    %469 = vmatprep.subr.mxu0 0.0
    %470 = vmatpush1.msra.mxu0 %v412
    %471 = vmatprep.subr.mxu0 0.0
    %472 = vmatpush1.msra.mxu0 %v411
    %473 = vmatprep.subr.mxu0 0.0
    %474 = vmatpush1.msra.mxu0 %v410
    %475 = vmatprep.subr.mxu0 0.0
    %476 = vmatpush1.msra.mxu0 %v409
    %477 = vmatprep.subr.mxu0 0.0
    %478 = vmatpush1.msra.mxu0 %v408
    %479 = vmatprep.subr.mxu0 0.0
    %480 = vmatpush2.msra.mxu0 %v439
    %481 = vmatprep.subr.mxu0 0.0
    %482 = vmatpush2.msra.mxu0 %v438
    %483 = vmatprep.subr.mxu0 0.0
    %484 = vmatpush2.msra.mxu0 %v437
    %485 = vmatprep.subr.mxu0 0.0
    %486 = vmatpush2.msra.mxu0 %v436
    %487 = vmatprep.subr.mxu0 0.0
    %488 = vmatpush2.msra.mxu0 %v435
    %489 = vmatprep.subr.mxu0 0.0
    %490 = vmatpush2.msra.mxu0 %v434
    %491 = vmatprep.subr.mxu0 0.0
    %492 = vmatpush2.msra.mxu0 %v433
    %493 = vmatprep.subr.mxu0 0.0
    %494 = vmatpush2.msra.mxu0 %v432
    %495 = vmatprep.subr.mxu0 0.0
    %496 = vmatpush2.msra.mxu0 %v431
    %497 = vmatprep.subr.mxu0 0.0
    %498 = vmatpush2.msra.mxu0 %v430
    %499 = vmatprep.subr.mxu0 0.0
    %500 = vmatpush2.msra.mxu0 %v429
    %501 = vmatprep.subr.mxu0 0.0
    %502 = vmatpush2.msra.mxu0 %v428
    %503 = vmatprep.subr.mxu0 0.0
    %504 = vmatpush2.msra.mxu0 %v427
    %505 = vmatprep.subr.mxu0 0.0
    %506 = vmatpush2.msra.mxu0 %v426
    %507 = vmatprep.subr.mxu0 0.0
    %508 = vmatpush2.msra.mxu0 %v425
    %509 = vmatprep.subr.mxu0 0.0
    %510 = vmatpush2.msra.mxu0 %v424
    %511 = vmatprep.mubr.f32.mxu0 %v401
    %512 = vmatmul.mubr.f32.gmra.mxu0 %v400
    %v513 = vpop.f32.mrf.mxu0
    %v514 = vadd.f32 %v445, %v513
    %v515 = vpop.f32.mrf.mxu0
    %516 = vmatprep.mubr.f32.mxu0 %v403
    %517 = vmatmul.mubr.f32.gmra.mxu0 %v402
    %v518 = vpop.f32.mrf.mxu0
    %v519 = vadd.f32 %v445, %v518
    %v520 = vpop.f32.mrf.mxu0
    %521 = vmatprep.mubr.f32.mxu0 %v405
    %522 = vmatmul.mubr.f32.gmra.mxu0 %v404
    %v523 = vpop.f32.mrf.mxu0
    %v524 = vadd.f32 %v445, %v523
    %v525 = vpop.f32.mrf.mxu0
    %526 = vmatprep.mubr.f32.mxu0 %v407
    %527 = vmatmul.mubr.f32.gmra.mxu0 %v406
    %v528 = vpop.f32.mrf.mxu0
    %v529 = vadd.f32 %v445, %v528
    %v530 = vpop.f32.mrf.mxu0
    %531 = vdwg.mxu0
    %532 = vst [vmem:[%s7] sm:$0xff] %v514
    %533 = vst [vmem:[%s7 + $0x8] sm:$0xff] %v519
    %534 = vst [vmem:[%s7 + $0x10] sm:$0xff] %v524
    %535 = vst [vmem:[%s7 + $0x18] sm:$0x1] %v529
    // Predicated region
    $region38: #{mlp_forward.1} parent=1 // pred_check
      _
    $region39: #{mlp_forward.1} parent=1 // pred_check_branch
      %537 = sbr.rel (0) target = $region41
    $region40: #{mlp_forward.1} parent=1 // pred_region
      _
    $region41: #{mlp_forward.1} parent=1 // pred_fallthru
      _
    // Predicated region
    $region42: #{mlp_forward.1} parent=1 // pred_check
      _
    $region43: #{mlp_forward.1} parent=1 // pred_check_branch
      %539 = sbr.rel (0) target = $region45
    $region44: #{mlp_forward.1} parent=1 // pred_region
      _
    $region45: #{mlp_forward.1} parent=1 // pred_fallthru
      _
    %540 = vsyncpa [#allocation3], 1
    %541 = vsyncpa [#allocation5], 1

</llo_original>
